<compile_context>
chip_gen: v5e
topology: v5e:2x2
jax: 0.10.0
libtpu: 0.0.40
codegen_flags: <defaults>
</compile_context>

<pallas_src>
import functools

import jax
import jax.numpy as jnp
import numpy as np
from jax.experimental import pallas as pl
from jax.experimental.pallas import tpu as pltpu

LANE = 128
_NEG_INF = -1e30  # mask value for padded class columns in b3


def _round_up(v, m):
    return (v + m - 1) // m * m


def _pick_tile(n, cap, align):
    """Largest multiple of `align` that divides n and is <= cap (None if none)."""
    cap = min(n, cap)
    best = None
    d = align
    while d <= cap:
        if n % d == 0:
            best = d
        d += align
    return best


def _vmem_limit_bytes():
    """Generation-aware VMEM budget: ~70% of physical, capped at 100 MiB."""
    try:
        cap = int(pltpu.get_tpu_info().vmem_capacity_bytes)
    except Exception:
        cap = 64 * 1024 * 1024
    return min(int(cap * 0.7), 100 * 1024 * 1024)


# ----------------------------------------------------------------------------
# Kernel 1: fused gc1 + ReLU + gc2 + ReLU + per-partition gc3 support matmul.
# One partition (diagonal adjacency block) per grid step.  The dense, mostly
# zero (N, P*H2) activation is never materialized: emits support = h2 @ W3.
# ----------------------------------------------------------------------------
def _bd_fused_kernel(x_ref, adj_ref, w1_ref, b1_ref, w2_ref, b2_ref, w3_ref,
                     sup_ref):
    dt = x_ref.dtype                      # matmul operand dtype (bf16 or f32)
    adj = adj_ref[...]                    # (S, S) diagonal block of adj

    # gc1: h1 = relu(adj_pp @ (x_p @ W1_p) + b1_p)   (f32 accumulation)
    s1 = jnp.dot(x_ref[...], w1_ref[...], preferred_element_type=jnp.float32)
    h1 = jnp.maximum(
        jnp.dot(adj, s1.astype(dt), preferred_element_type=jnp.float32)
        + b1_ref[...], 0.0)
    # TODO(synk): F.dropout(x, p, training=self.training) is identity in eval.

    # gc2 (diagonal feature block): relu(adj_pp @ (h1 @ W2_p) + b2_p)
    s2 = jnp.dot(h1.astype(dt), w2_ref[...], preferred_element_type=jnp.float32)
    h2 = jnp.maximum(
        jnp.dot(adj, s2.astype(dt), preferred_element_type=jnp.float32)
        + b2_ref[...], 0.0)

    # gc3 support, per partition: support_p = h2_p @ W3[p]   (S, Cp)
    sup_ref[...] = jnp.dot(h2.astype(dt), w3_ref[...],
                           preferred_element_type=jnp.float32
                           ).astype(sup_ref.dtype)


def bd_fused_layers(x_p, adj_p, w1, b1, w2, b2, w3):
    """x_p: (N, Fp) features in partition order; adj_p: (N, N) permuted adj.
    Per-partition padded weights: w1 (P,Fp,H1p), w2 (P,H1p,H2p), w3 (P,H2p,Cp).
    Returns support = h2 @ W3 of shape (N, Cp) in the matmul dtype."""
    P, Fp, H1p = w1.shape
    H2p = w2.shape[-1]
    Cp = w3.shape[-1]
    N = x_p.shape[0]
    S = N // P
    dt = x_p.dtype
    isz = np.dtype(dt).itemsize
    vmem_limit = _vmem_limit_bytes()

    flops = 2 * P * (S * Fp * H1p + S * S * H1p + S * H1p * H2p + S * S * H2p
                     + S * H2p * Cp)
    bytes_accessed = int(
        (x_p.size + P * S * S + w1.size + w2.size + w3.size + N * Cp) * isz
        + (b1.size + b2.size) * 4)

    return pl.pallas_call(
        _bd_fused_kernel,
        out_shape=jax.ShapeDtypeStruct((N, Cp), dt),
        grid=(P,),
        in_specs=[
            pl.BlockSpec((S, Fp), lambda p: (p, 0)),          # x rows of I_p
            pl.BlockSpec((S, S), lambda p: (p, p)),           # diag block of adj
            pl.BlockSpec((None, Fp, H1p), lambda p: (p, 0, 0)),
            pl.BlockSpec((None, 1, H1p), lambda p: (p, 0, 0)),
            pl.BlockSpec((None, H1p, H2p), lambda p: (p, 0, 0)),
            pl.BlockSpec((None, 1, H2p), lambda p: (p, 0, 0)),
            pl.BlockSpec((None, H2p, Cp), lambda p: (p, 0, 0)),
        ],
        out_specs=pl.BlockSpec((S, Cp), lambda p: (p, 0)),
        compiler_params=pltpu.CompilerParams(
            dimension_semantics=("parallel",),                # v7x 2-TC sharding
            vmem_limit_bytes=vmem_limit),
        cost_estimate=pl.CostEstimate(flops=flops, transcendentals=0,
                                      bytes_accessed=bytes_accessed),
    )(x_p, adj_p, w1, b1, w2, b2, w3)


# ----------------------------------------------------------------------------
# Kernel 2: gc3 aggregation  y = adj @ support + b3, then log_softmax.
# Grid = (row tiles, K tiles); reduction axis last ('arbitrary').  Support is
# full-K resident in VMEM; accumulation goes directly into out_ref.
# ----------------------------------------------------------------------------
def _gc3_kernel(adj_ref, sup_ref, b3_ref, out_ref, *, tk):
    k = pl.program_id(1)

    @pl.when(k == 0)
    def _():
        out_ref[...] = jnp.zeros_like(out_ref)

    align = 128 if tk % 128 == 0 else 8
    start = pl.multiple_of(k * tk, align)
    out_ref[...] += jnp.dot(adj_ref[...], sup_ref[pl.ds(start, tk), :],
                            preferred_element_type=jnp.float32)

    @pl.when(k == pl.num_programs(1) - 1)
    def _():
        y = out_ref[...] + b3_ref[...]
        m = jnp.max(y, axis=1, keepdims=True)
        z = y - m
        out_ref[...] = z - jnp.log(jnp.sum(jnp.exp(z), axis=1, keepdims=True))


def gc3_aggregate_logsoftmax(adj_p, support, b3, *, tm=None, tk=None):
    N = adj_p.shape[0]
    Cp = support.shape[-1]
    isz = np.dtype(adj_p.dtype).itemsize
    sup_isz = np.dtype(support.dtype).itemsize
    vmem_limit = _vmem_limit_bytes()

    if tm is None:
        # Big row tiles, but keep >=2 of them so both v7x TensorCores get work.
        tm = (_pick_tile(N, max(LANE, N // 2), LANE)
              or _pick_tile(N, max(8, N // 2), 8)
              or N)
    if tk is None:
        # Prefer tk = N (single K step) when the double-buffered adj row-stripe
        # plus resident support fits within ~half the VMEM budget.
        budget = vmem_limit // 2
        resident = N * Cp * sup_isz + 2 * tm * Cp * 4
        cap_tk = max(LANE, (budget - resident) // max(1, 2 * tm * isz))
        tk = N if N <= cap_tk else (_pick_tile(N, cap_tk, LANE) or N)
    # TODO(synk): general N needs row/col padding or masked edge tiles.
    assert N % tm == 0 and N % tk == 0

    flops = 2 * N * N * Cp + 5 * N * Cp
    bytes_accessed = int(N * N * isz + N * Cp * sup_isz + Cp * 4 + N * Cp * 4)

    return pl.pallas_call(
        functools.partial(_gc3_kernel, tk=tk),
        out_shape=jax.ShapeDtypeStruct((N, Cp), jnp.float32),
        grid=(N // tm, N // tk),                      # reduction axis last
        in_specs=[
            pl.BlockSpec((tm, tk), lambda i, k: (i, k)),
            pl.BlockSpec((N, Cp), lambda i, k: (0, 0)),   # resident full support
            pl.BlockSpec((1, Cp), lambda i, k: (0, 0)),
        ],
        out_specs=pl.BlockSpec((tm, Cp), lambda i, k: (i, 0)),
        compiler_params=pltpu.CompilerParams(
            dimension_semantics=("parallel", "arbitrary"),
            vmem_limit_bytes=vmem_limit),
        cost_estimate=pl.CostEstimate(flops=flops, transcendentals=N * Cp,
                                      bytes_accessed=bytes_accessed),
    )(adj_p, support, b3)


# ----------------------------------------------------------------------------
# One-time preprocessing (hoisted out of the per-call path):
#   * permute nodes into partition order (equal-size partitions required),
#   * cast matmul operands to bf16 (default),
#   * zero-pad lane dims F/H1/H2 to 128; pad C to 128 with b3 = -1e30 masks.
# ----------------------------------------------------------------------------
def prepare_gcn_bd(x, adj, params, partitions, *, matmul_dtype=jnp.bfloat16):
    P = len(partitions)
    sizes = {len(p) for p in partitions}
    assert len(sizes) == 1, "equal-size partitions required"
    S = sizes.pop()
    N = x.shape[0]
    assert N == P * S

    F = x.shape[1]
    H1 = params["w1"].shape[-1]
    H2 = params["w2"].shape[-1]
    C = params["w3"].shape[-1]
    Fp, H1p, H2p, Cp = (_round_up(d, LANE) for d in (F, H1, H2, C))

    perm = np.concatenate([np.asarray(p, dtype=np.int64) for p in partitions])
    inv_perm = np.argsort(perm)

    x_np = np.zeros((N, Fp), np.float32)
    x_np[:, :F] = np.asarray(x, np.float32)[perm]
    adj_np = np.asarray(adj, np.float32)[perm][:, perm]

    w1 = np.zeros((P, Fp, H1p), np.float32)
    w1[:, :F, :H1] = np.asarray(params["w1"], np.float32)
    b1 = np.zeros((P, 1, H1p), np.float32)
    b1[:, :, :H1] = np.asarray(params["b1"], np.float32)
    w2 = np.zeros((P, H1p, H2p), np.float32)
    w2[:, :H1, :H2] = np.asarray(params["w2"], np.float32)
    b2 = np.zeros((P, 1, H2p), np.float32)
    b2[:, :, :H2] = np.asarray(params["b2"], np.float32)
    w3 = np.zeros((P, H2p, Cp), np.float32)
    w3[:, :H2, :C] = np.asarray(params["w3"], np.float32).reshape(P, H2, C)
    b3 = np.full((1, Cp), _NEG_INF, np.float32)   # mask padded classes
    b3[:, :C] = np.asarray(params["b3"], np.float32)

    return dict(
        x_p=jnp.asarray(x_np, matmul_dtype),
        adj_p=jnp.asarray(adj_np, matmul_dtype),
        w1=jnp.asarray(w1, matmul_dtype),
        b1=jnp.asarray(b1, jnp.float32),
        w2=jnp.asarray(w2, matmul_dtype),
        b2=jnp.asarray(b2, jnp.float32),
        w3=jnp.asarray(w3, matmul_dtype),
        b3=jnp.asarray(b3, jnp.float32),
        inv_perm=jnp.asarray(inv_perm, jnp.int32),
        nclass=C,
    )


def gcn_bd_forward_prepared(prep, *, tm=None, tk=None):
    support = bd_fused_layers(prep["x_p"], prep["adj_p"], prep["w1"],
                              prep["b1"], prep["w2"], prep["b2"], prep["w3"])
    out_p = gc3_aggregate_logsoftmax(prep["adj_p"], support, prep["b3"],
                                     tm=tm, tk=tk)
    # Inverse node permutation + drop padded class columns (tiny (N, C) ops).
    return out_p[prep["inv_perm"]][:, :prep["nclass"]]


def gcn_bd_forward(x, adj, params, partitions, *, matmul_dtype=jnp.bfloat16,
                   tm=None, tk=None):
    prep = prepare_gcn_bd(x, adj, params, partitions, matmul_dtype=matmul_dtype)
    return gcn_bd_forward_prepared(prep, tm=tm, tk=tk)


# ----------------------------------------------------------------------------
# Float64 NumPy reference (same semantics, arbitrary partitions).
# ----------------------------------------------------------------------------
def reference_forward_np(x, adj, params, partitions):
    x = np.asarray(x, np.float64)
    adj = np.asarray(adj, np.float64)
    w1 = np.asarray(params["w1"], np.float64)
    b1 = np.asarray(params["b1"], np.float64)
    w2 = np.asarray(params["w2"], np.float64)
    b2 = np.asarray(params["b2"], np.float64)
    w3 = np.asarray(params["w3"], np.float64)
    b3 = np.asarray(params["b3"], np.float64)
    P = len(partitions)
    N = x.shape[0]
    H1 = w1.shape[-1]
    H2 = w2.shape[-1]

    h1 = np.zeros((N, H1), np.float64)
    for p, idx_list in enumerate(partitions):
        idx = np.asarray(idx_list)
        a = adj[np.ix_(idx, idx)]
        h1[idx] = np.maximum(a @ (x[idx] @ w1[p]) + b1[p], 0.0)

    h2 = np.zeros((N, P * H2), np.float64)
    for p, idx_list in enumerate(partitions):
        idx = np.asarray(idx_list)
        a = adj[np.ix_(idx, idx)]
        cols = np.arange(p * H2, (p + 1) * H2)
        h2[np.ix_(idx, cols)] = np.maximum(a @ (h1[idx] @ w2[p]) + b2[p], 0.0)

    y = adj @ (h2 @ w3) + b3
    m = y.max(axis=1, keepdims=True)
    z = y - m
    return z - np.log(np.exp(z).sum(axis=1, keepdims=True))


def init_params(key, F, H1, H2, C, P):
    ks = jax.random.split(key, 6)

    def u(k, shape, fan_out):
        stdv = 1.0 / float(np.sqrt(fan_out))
        return jax.random.uniform(k, shape, jnp.float32, -stdv, stdv)

    return dict(
        w1=u(ks[0], (P, F, H1), H1),
        b1=u(ks[1], (P, 1, H1), H1),
        w2=u(ks[2], (P, H1, H2), H2),
        b2=u(ks[3], (P, 1, H2), H2),
        w3=u(ks[4], (H2 * P, C), C),
        b3=u(ks[5], (1, C), C),
    )


if __name__ == "__main__":
    key = jax.random.PRNGKey(0)
    P, S = 4, 128                 # 4 partitions of 128 nodes (lane-aligned)
    N = P * S                     # 512 nodes
    F, C = 16, 8                  # nfeatures, nclass
    H1 = H2 = 16                  # layer1_hidden, layer2_hidden (from module)

    # Non-contiguous, equal-size partitions (interleaved) to exercise the
    # node-permutation preprocessing.
    partitions = [list(range(p, N, P)) for p in range(P)]

    kx, ka, kp = jax.random.split(key, 3)
    x = jax.random.normal(kx, (N, F), jnp.float32)

    # Deterministic symmetric-normalized adjacency with self-loops.
    a = (jax.random.uniform(ka, (N, N)) < 0.05).astype(jnp.float32)
    a = jnp.minimum(jnp.maximum(a, a.T) + jnp.eye(N, dtype=jnp.float32), 1.0)
    dinv = 1.0 / jnp.sqrt(jnp.sum(a, axis=1))
    adj = a * dinv[:, None] * dinv[None, :]

    params = init_params(kp, F, H1, H2, C, P)
    params_np = {k: np.asarray(v) for k, v in params.items()}
    ref = reference_forward_np(np.asarray(x), np.asarray(adj), params_np,
                               partitions)

    # Production path: bf16 matmul operands, one-time prepare (permutation,
    # padding, casts hoisted), auto tiles (tm=256 -> 2 row tiles for v7x,
    # tk=N -> single K step, support resident in VMEM).
    prep = prepare_gcn_bd(x, adj, params, partitions)
    out = gcn_bd_forward_prepared(prep)
    jax.block_until_ready(out)
    assert out.shape == (N, C)
    assert np.allclose(np.asarray(out, np.float64), ref, atol=0.1, rtol=0.05)

    # Exercise the multi-K accumulate-into-out_ref path with forced small tiles.
    out_small = gcn_bd_forward_prepared(prep, tm=128, tk=128)
    jax.block_until_ready(out_small)
    assert out_small.shape == (N, C)
    assert np.allclose(np.asarray(out_small, np.float64), ref,
                       atol=0.1, rtol=0.05)

    print("KERNEL_OK")
</pallas_src>

<mosaic_0001>
module attributes {stable_mosaic.version = 11 : i64} {
  func.func @_bd_fused_kernel(%arg0: i32, %arg1: memref<128x128xbf16, #tpu.memory_space<vmem>>, %arg2: memref<128x128xbf16, #tpu.memory_space<vmem>>, %arg3: memref<1x128x128xbf16, #tpu.memory_space<vmem>>, %arg4: memref<1x1x128xf32, #tpu.memory_space<vmem>>, %arg5: memref<1x128x128xbf16, #tpu.memory_space<vmem>>, %arg6: memref<1x1x128xf32, #tpu.memory_space<vmem>>, %arg7: memref<1x128x128xbf16, #tpu.memory_space<vmem>>, %arg8: memref<128x128xbf16, #tpu.memory_space<vmem>>) attributes {dimension_semantics = [#tpu.dimension_semantics<parallel>], iteration_bounds = array<i64: 4>, scalar_prefetch = 0 : i64, scratch_operands = 0 : i64, tpu.core_type = #tpu.core_type<tc>, window_params = [{transform_indices = @transform_0, window_bounds = array<i64: 128, 128>}, {transform_indices = @transform_1, window_bounds = array<i64: 128, 128>}, {transform_indices = @transform_2, window_bounds = array<i64: 1, 128, 128>}, {transform_indices = @transform_3, window_bounds = array<i64: 1, 1, 128>}, {transform_indices = @transform_4, window_bounds = array<i64: 1, 128, 128>}, {transform_indices = @transform_5, window_bounds = array<i64: 1, 1, 128>}, {transform_indices = @transform_6, window_bounds = array<i64: 1, 128, 128>}, {transform_indices = @transform_7, window_bounds = array<i64: 128, 128>}]} {
    %c0 = arith.constant 0 : index
    %c0_0 = arith.constant 0 : index
    %0 = vector.load %arg2[%c0, %c0_0] : memref<128x128xbf16, #tpu.memory_space<vmem>>, vector<128x128xbf16>
    %c0_1 = arith.constant 0 : index
    %c0_2 = arith.constant 0 : index
    %1 = vector.load %arg1[%c0_1, %c0_2] : memref<128x128xbf16, #tpu.memory_space<vmem>>, vector<128x128xbf16>
    %c0_3 = arith.constant 0 : index
    %c0_4 = arith.constant 0 : index
    %c0_5 = arith.constant 0 : index
    %2 = vector.load %arg3[%c0_3, %c0_4, %c0_5] : memref<1x128x128xbf16, #tpu.memory_space<vmem>>, vector<1x128x128xbf16>
    %3 = vector.shape_cast %2 : vector<1x128x128xbf16> to vector<128x128xbf16>
    %cst = arith.constant dense<0.000000e+00> : vector<128x128xf32>
    %4 = tpu.matmul %1, %3, %cst {dimension_numbers = #tpu.dot_dimension_numbers<[1], [0], [0], [1], [0, 0, 1, 1], [], []>} : vector<128x128xbf16>, vector<128x128xbf16>, vector<128x128xf32> -> vector<128x128xf32>
    %5 = arith.truncf %4 : vector<128x128xf32> to vector<128x128xbf16>
    %cst_6 = arith.constant dense<0.000000e+00> : vector<128x128xf32>
    %6 = tpu.matmul %0, %5, %cst_6 {dimension_numbers = #tpu.dot_dimension_numbers<[1], [0], [0], [1], [0, 0, 1, 1], [], []>} : vector<128x128xbf16>, vector<128x128xbf16>, vector<128x128xf32> -> vector<128x128xf32>
    %c0_7 = arith.constant 0 : index
    %c0_8 = arith.constant 0 : index
    %c0_9 = arith.constant 0 : index
    %7 = vector.load %arg4[%c0_7, %c0_8, %c0_9] : memref<1x1x128xf32, #tpu.memory_space<vmem>>, vector<1x1x128xf32>
    %8 = vector.shape_cast %7 : vector<1x1x128xf32> to vector<1x128xf32>
    %9 = vector.broadcast %8 : vector<1x128xf32> to vector<128x128xf32>
    %10 = arith.addf %6, %9 : vector<128x128xf32>
    %cst_10 = arith.constant 0.000000e+00 : f32
    %11 = vector.broadcast %cst_10 : f32 to vector<128x128xf32>
    %12 = arith.maximumf %10, %11 : vector<128x128xf32>
    %13 = arith.truncf %12 : vector<128x128xf32> to vector<128x128xbf16>
    %c0_11 = arith.constant 0 : index
    %c0_12 = arith.constant 0 : index
    %c0_13 = arith.constant 0 : index
    %14 = vector.load %arg5[%c0_11, %c0_12, %c0_13] : memref<1x128x128xbf16, #tpu.memory_space<vmem>>, vector<1x128x128xbf16>
    %15 = vector.shape_cast %14 : vector<1x128x128xbf16> to vector<128x128xbf16>
    %cst_14 = arith.constant dense<0.000000e+00> : vector<128x128xf32>
    %16 = tpu.matmul %13, %15, %cst_14 {dimension_numbers = #tpu.dot_dimension_numbers<[1], [0], [0], [1], [0, 0, 1, 1], [], []>} : vector<128x128xbf16>, vector<128x128xbf16>, vector<128x128xf32> -> vector<128x128xf32>
    %17 = arith.truncf %16 : vector<128x128xf32> to vector<128x128xbf16>
    %cst_15 = arith.constant dense<0.000000e+00> : vector<128x128xf32>
    %18 = tpu.matmul %0, %17, %cst_15 {dimension_numbers = #tpu.dot_dimension_numbers<[1], [0], [0], [1], [0, 0, 1, 1], [], []>} : vector<128x128xbf16>, vector<128x128xbf16>, vector<128x128xf32> -> vector<128x128xf32>
    %c0_16 = arith.constant 0 : index
    %c0_17 = arith.constant 0 : index
    %c0_18 = arith.constant 0 : index
    %19 = vector.load %arg6[%c0_16, %c0_17, %c0_18] : memref<1x1x128xf32, #tpu.memory_space<vmem>>, vector<1x1x128xf32>
    %20 = vector.shape_cast %19 : vector<1x1x128xf32> to vector<1x128xf32>
    %21 = vector.broadcast %20 : vector<1x128xf32> to vector<128x128xf32>
    %22 = arith.addf %18, %21 : vector<128x128xf32>
    %cst_19 = arith.constant 0.000000e+00 : f32
    %23 = vector.broadcast %cst_19 : f32 to vector<128x128xf32>
    %24 = arith.maximumf %22, %23 : vector<128x128xf32>
    %25 = arith.truncf %24 : vector<128x128xf32> to vector<128x128xbf16>
    %c0_20 = arith.constant 0 : index
    %c0_21 = arith.constant 0 : index
    %c0_22 = arith.constant 0 : index
    %26 = vector.load %arg7[%c0_20, %c0_21, %c0_22] : memref<1x128x128xbf16, #tpu.memory_space<vmem>>, vector<1x128x128xbf16>
    %27 = vector.shape_cast %26 : vector<1x128x128xbf16> to vector<128x128xbf16>
    %cst_23 = arith.constant dense<0.000000e+00> : vector<128x128xf32>
    %28 = tpu.matmul %25, %27, %cst_23 {dimension_numbers = #tpu.dot_dimension_numbers<[1], [0], [0], [1], [0, 0, 1, 1], [], []>} : vector<128x128xbf16>, vector<128x128xbf16>, vector<128x128xf32> -> vector<128x128xf32>
    %29 = arith.truncf %28 : vector<128x128xf32> to vector<128x128xbf16>
    %c0_24 = arith.constant 0 : index
    %c0_25 = arith.constant 0 : index
    %30 = vector.load %arg8[%c0_24, %c0_25] : memref<128x128xbf16, #tpu.memory_space<vmem>>, vector<128x128xbf16>
    tpu.vector_store %arg8[%c0_24, %c0_25], %29 {strides = array<i32>} : memref<128x128xbf16, #tpu.memory_space<vmem>>, vector<128x128xbf16>,
    return
  }
  func.func @transform_0(%arg0: i32) -> (i32, i32) {
    %c0_i32 = arith.constant 0 : i32
    %c0_i32_0 = arith.constant 0 : i32
    return %arg0, %c0_i32 : i32, i32
  }
  func.func @transform_1(%arg0: i32) -> (i32, i32) {
    %c0_i32 = arith.constant 0 : i32
    return %arg0, %arg0 : i32, i32
  }
  func.func @transform_2(%arg0: i32) -> (i32, i32, i32) {
    %c0_i32 = arith.constant 0 : i32
    %c0_i32_0 = arith.constant 0 : i32
    %c0_i32_1 = arith.constant 0 : i32
    return %arg0, %c0_i32, %c0_i32_0 : i32, i32, i32
  }
  func.func @transform_3(%arg0: i32) -> (i32, i32, i32) {
    %c0_i32 = arith.constant 0 : i32
    %c0_i32_0 = arith.constant 0 : i32
    %c0_i32_1 = arith.constant 0 : i32
    return %arg0, %c0_i32, %c0_i32_0 : i32, i32, i32
  }
  func.func @transform_4(%arg0: i32) -> (i32, i32, i32) {
    %c0_i32 = arith.constant 0 : i32
    %c0_i32_0 = arith.constant 0 : i32
    %c0_i32_1 = arith.constant 0 : i32
    return %arg0, %c0_i32, %c0_i32_0 : i32, i32, i32
  }
  func.func @transform_5(%arg0: i32) -> (i32, i32, i32) {
    %c0_i32 = arith.constant 0 : i32
    %c0_i32_0 = arith.constant 0 : i32
    %c0_i32_1 = arith.constant 0 : i32
    return %arg0, %c0_i32, %c0_i32_0 : i32, i32, i32
  }
  func.func @transform_6(%arg0: i32) -> (i32, i32, i32) {
    %c0_i32 = arith.constant 0 : i32
    %c0_i32_0 = arith.constant 0 : i32
    %c0_i32_1 = arith.constant 0 : i32
    return %arg0, %c0_i32, %c0_i32_0 : i32, i32, i32
  }
  func.func @transform_7(%arg0: i32) -> (i32, i32) {
    %c0_i32 = arith.constant 0 : i32
    %c0_i32_0 = arith.constant 0 : i32
    return %arg0, %c0_i32 : i32, i32
  }
}

</mosaic_0001>

<llo_original>
// kernel: tpu_custom_call.1
$region0: #{tpu_custom_call.1}
  #allocation0 [shape = 'u32[]', space=smem, size = 0x4, offset = 0x4, fixed_abs, tag = 'smem constant byte address 0x4 - core index']
  #allocation1 [shape = 'u32[72,128]{1,0:T(1,128)}', space=vmem, size = 0x9000, scoped, tag = 'internal scratch']
  %s0 = inlined_call_operand.hbm [shape: bf16[512,128], index: 0, kind: input, shape index: {}]
  %s1 = inlined_call_operand.hbm [shape: bf16[512,512], index: 1, kind: input, shape index: {}]
  %s2 = inlined_call_operand.hbm [shape: bf16[4,128,128], index: 2, kind: input, shape index: {}]
  %s3 = inlined_call_operand.hbm [shape: f32[4,1,128], index: 3, kind: input, shape index: {}]
  %s4 = inlined_call_operand.hbm [shape: bf16[4,128,128], index: 4, kind: input, shape index: {}]
  %s5 = inlined_call_operand.vmem [shape: f32[4,1,128], index: 5, kind: input, shape index: {}]
  %s6 = inlined_call_operand.hbm [shape: bf16[4,128,128], index: 6, kind: input, shape index: {}]
  %s7 = inlined_call_operand.hbm [shape: bf16[512,128], index: 7, kind: output, shape index: {}]
  %s8 = sld [smem:[#allocation0]]
  $region85: #{tpu_custom_call.1} parent=0
    _
  %s10 = ssub.s32 1, %s8
  %s11 = scalar_select 0, %s10, %s8
  $region1: #{tpu_custom_call.1} parent=0
    #allocation2 [shape = 'u8[65536]{0}', space=vmem, size = 0x10000, scoped, tag = 'input window, operand 0']
    #allocation3 [shape = 's32[2]{0}', space=sflag, size = 0x8, scoped, tag = 'scoped memory for tpu_custom_call.1']
    #allocation4 [shape = 's32[2]{0}', space=sflag, size = 0x8, scoped, tag = 'scoped memory for tpu_custom_call.1']
    #allocation5 [shape = 'u8[65536]{0}', space=vmem, size = 0x10000, scoped, tag = 'input window, operand 1']
    #allocation6 [shape = 's32[2]{0}', space=sflag, size = 0x8, scoped, tag = 'scoped memory for tpu_custom_call.1']
    #allocation7 [shape = 'u8[65536]{0}', space=vmem, size = 0x10000, scoped, tag = 'input window, operand 2']
    #allocation8 [shape = 'u8[1024]{0}', space=vmem, size = 0x400, scoped, tag = 'input window, operand 3']
    #allocation9 [shape = 's32[2]{0}', space=sflag, size = 0x8, scoped, tag = 'scoped memory for tpu_custom_call.1']
    #allocation10 [shape = 'u8[65536]{0}', space=vmem, size = 0x10000, scoped, tag = 'input window, operand 4']
    #allocation11 [shape = 'u8[65536]{0}', space=vmem, size = 0x10000, scoped, tag = 'input window, operand 6']
    #allocation12 [shape = 's32[2]{0}', space=sflag, size = 0x8, scoped, tag = 'scoped memory for tpu_custom_call.1']
    #allocation13 [shape = 'u8[65536]{0}', space=vmem, size = 0x10000, scoped, tag = 'output window, operand 0']
    %12 = vsyncpa [#allocation3], 0
    %s13 = scalar_lea.sflag [#allocation3], 1
    %14 = vsyncpa %s13, 0
    %15 = vsyncpa [#allocation6], 0
    %s16 = scalar_lea.sflag [#allocation6], 1
    %17 = vsyncpa %s16, 0
    %18 = vsyncpa [#allocation9], 0
    %s19 = scalar_lea.sflag [#allocation9], 1
    %20 = vsyncpa %s19, 0
    %21 = vsyncpa [#allocation12], 0
    %s22 = scalar_lea.sflag [#allocation12], 1
    %23 = vsyncpa %s22, 0
    %24 = vsyncpa [#allocation4], 0
    %s25 = scalar_lea.sflag [#allocation4], 1
    %26 = vsyncpa %s25, 0
    loop: start=0, step=1, limit=6
    $region2: #{tpu_custom_call.1} parent=1 // loop_pre_header
      _
    $region3: #{tpu_custom_call.1} parent=1 // loop_header
      %s28 = sphi 0, %s32
      %p29 = scmp.ge.s32.totalorder %s28, 6
      %s38 = sphi 0, %s40
      %s41 = sphi 0, %s38
      %s42 = sphi 0, %s41
      %s58 = sphi 0, %s42
      %s66 = sphi 0, %s68
      %s69 = sphi 0, %s66
      %s70 = sphi 0, %s69
      %s86 = sphi 0, %s70
      %s92 = sphi 0, %s94
      %s95 = sphi 0, %s92
      %s96 = sphi 0, %s95
      %s112 = sphi 0, %s96
      %s118 = sphi 0, %s120
      %s121 = sphi 0, %s118
      %s122 = sphi 0, %s121
      %s138 = sphi 0, %s122
      %s144 = sphi 0, %s146
      %s147 = sphi 0, %s144
      %s148 = sphi 0, %s147
      %s164 = sphi 0, %s148
      %s170 = sphi 0, %s172
      %s173 = sphi 0, %s170
      %s174 = sphi 0, %s173
      %s190 = sphi 0, %s174
      %s196 = sphi 0, %s198
      %s199 = sphi 0, %s196
      %s200 = sphi 0, %s199
      %s216 = sphi 0, %s200
      %s222 = sphi 0, %s224
      %s225 = sphi 0, %s222
      %s226 = sphi 0, %s225
      %s242 = sphi 0, %s226
    $region4: #{tpu_custom_call.1} parent=1 // loop_header_branch
      %31 = sbr.rel (%p29) target = $region8
    $region5: #{tpu_custom_call.1} parent=1 // loop_body
      %s33 = ssub.s32 %s28, 1
      %s34 = ssub.s32 %s28, 2
      %s35 = sadd.s32 %s28, 1
      %s36 = ssub.s32 %s28, %s35
      %p37 = scmp.eq.s32.totalorder %s36, 0
      %s39 = sadd.s32 %s38, 1
      %s40 = scalar_select %p37, %s38, %s39
      %p43 = pneg %p37
      %p44 = scmp.eq.s32.totalorder %s28, 3
      %p45 = por %p43, %p44
      %p46 = scmp.ne.s32.totalorder %s38, %s41
      %p47 = scmp.eq.s32.totalorder %s28, 0
      %p48 = por %p46, %p47
      %p49 = scmp.ne.s32.totalorder %s38, %s41
      %p50 = scmp.eq.s32.totalorder %s33, 3
      %p51 = por %p49, %p50
      %p52 = scmp.ne.s32.totalorder %s41, %s42
      %p53 = scmp.eq.s32.totalorder %s33, 0
      %p54 = por %p52, %p53
      %p55 = scmp.ne.s32.totalorder %s41, %s42
      %p56 = scmp.eq.s32.totalorder %s34, 3
      %p57 = por %p55, %p56
      %p59 = scmp.ne.s32.totalorder %s42, %s58
      %p60 = scmp.eq.s32.totalorder %s34, 0
      %p61 = por %p59, %p60
      %s62 = ssub.s32 %s28, %s35
      %s63 = ssub.s32 %s28, %s35
      %s64 = sor.u32 %s62, %s63
      %p65 = scmp.eq.s32.totalorder %s64, 0
      %s67 = sadd.s32 %s66, 1
      %s68 = scalar_select %p65, %s66, %s67
      %p71 = pneg %p65
      %p72 = scmp.eq.s32.totalorder %s28, 3
      %p73 = por %p71, %p72
      %p74 = scmp.ne.s32.totalorder %s66, %s69
      %p75 = scmp.eq.s32.totalorder %s28, 0
      %p76 = por %p74, %p75
      %p77 = scmp.ne.s32.totalorder %s66, %s69
      %p78 = scmp.eq.s32.totalorder %s33, 3
      %p79 = por %p77, %p78
      %p80 = scmp.ne.s32.totalorder %s69, %s70
      %p81 = scmp.eq.s32.totalorder %s33, 0
      %p82 = por %p80, %p81
      %p83 = scmp.ne.s32.totalorder %s69, %s70
      %p84 = scmp.eq.s32.totalorder %s34, 3
      %p85 = por %p83, %p84
      %p87 = scmp.ne.s32.totalorder %s70, %s86
      %p88 = scmp.eq.s32.totalorder %s34, 0
      %p89 = por %p87, %p88
      %s90 = ssub.s32 %s28, %s35
      %p91 = scmp.eq.s32.totalorder %s90, 0
      %s93 = sadd.s32 %s92, 1
      %s94 = scalar_select %p91, %s92, %s93
      %p97 = pneg %p91
      %p98 = scmp.eq.s32.totalorder %s28, 3
      %p99 = por %p97, %p98
      %p100 = scmp.ne.s32.totalorder %s92, %s95
      %p101 = scmp.eq.s32.totalorder %s28, 0
      %p102 = por %p100, %p101
      %p103 = scmp.ne.s32.totalorder %s92, %s95
      %p104 = scmp.eq.s32.totalorder %s33, 3
      %p105 = por %p103, %p104
      %p106 = scmp.ne.s32.totalorder %s95, %s96
      %p107 = scmp.eq.s32.totalorder %s33, 0
      %p108 = por %p106, %p107
      %p109 = scmp.ne.s32.totalorder %s95, %s96
      %p110 = scmp.eq.s32.totalorder %s34, 3
      %p111 = por %p109, %p110
      %p113 = scmp.ne.s32.totalorder %s96, %s112
      %p114 = scmp.eq.s32.totalorder %s34, 0
      %p115 = por %p113, %p114
      %s116 = ssub.s32 %s28, %s35
      %p117 = scmp.eq.s32.totalorder %s116, 0
      %s119 = sadd.s32 %s118, 1
      %s120 = scalar_select %p117, %s118, %s119
      %p123 = pneg %p117
      %p124 = scmp.eq.s32.totalorder %s28, 3
      %p125 = por %p123, %p124
      %p126 = scmp.ne.s32.totalorder %s118, %s121
      %p127 = scmp.eq.s32.totalorder %s28, 0
      %p128 = por %p126, %p127
      %p129 = scmp.ne.s32.totalorder %s118, %s121
      %p130 = scmp.eq.s32.totalorder %s33, 3
      %p131 = por %p129, %p130
      %p132 = scmp.ne.s32.totalorder %s121, %s122
      %p133 = scmp.eq.s32.totalorder %s33, 0
      %p134 = por %p132, %p133
      %p135 = scmp.ne.s32.totalorder %s121, %s122
      %p136 = scmp.eq.s32.totalorder %s34, 3
      %p137 = por %p135, %p136
      %p139 = scmp.ne.s32.totalorder %s122, %s138
      %p140 = scmp.eq.s32.totalorder %s34, 0
      %p141 = por %p139, %p140
      %s142 = ssub.s32 %s28, %s35
      %p143 = scmp.eq.s32.totalorder %s142, 0
      %s145 = sadd.s32 %s144, 1
      %s146 = scalar_select %p143, %s144, %s145
      %p149 = pneg %p143
      %p150 = scmp.eq.s32.totalorder %s28, 3
      %p151 = por %p149, %p150
      %p152 = scmp.ne.s32.totalorder %s144, %s147
      %p153 = scmp.eq.s32.totalorder %s28, 0
      %p154 = por %p152, %p153
      %p155 = scmp.ne.s32.totalorder %s144, %s147
      %p156 = scmp.eq.s32.totalorder %s33, 3
      %p157 = por %p155, %p156
      %p158 = scmp.ne.s32.totalorder %s147, %s148
      %p159 = scmp.eq.s32.totalorder %s33, 0
      %p160 = por %p158, %p159
      %p161 = scmp.ne.s32.totalorder %s147, %s148
      %p162 = scmp.eq.s32.totalorder %s34, 3
      %p163 = por %p161, %p162
      %p165 = scmp.ne.s32.totalorder %s148, %s164
      %p166 = scmp.eq.s32.totalorder %s34, 0
      %p167 = por %p165, %p166
      %s168 = ssub.s32 %s28, %s35
      %p169 = scmp.eq.s32.totalorder %s168, 0
      %s171 = sadd.s32 %s170, 1
      %s172 = scalar_select %p169, %s170, %s171
      %p175 = pneg %p169
      %p176 = scmp.eq.s32.totalorder %s28, 3
      %p177 = por %p175, %p176
      %p178 = scmp.ne.s32.totalorder %s170, %s173
      %p179 = scmp.eq.s32.totalorder %s28, 0
      %p180 = por %p178, %p179
      %p181 = scmp.ne.s32.totalorder %s170, %s173
      %p182 = scmp.eq.s32.totalorder %s33, 3
      %p183 = por %p181, %p182
      %p184 = scmp.ne.s32.totalorder %s173, %s174
      %p185 = scmp.eq.s32.totalorder %s33, 0
      %p186 = por %p184, %p185
      %p187 = scmp.ne.s32.totalorder %s173, %s174
      %p188 = scmp.eq.s32.totalorder %s34, 3
      %p189 = por %p187, %p188
      %p191 = scmp.ne.s32.totalorder %s174, %s190
      %p192 = scmp.eq.s32.totalorder %s34, 0
      %p193 = por %p191, %p192
      %s194 = ssub.s32 %s28, %s35
      %p195 = scmp.eq.s32.totalorder %s194, 0
      %s197 = sadd.s32 %s196, 1
      %s198 = scalar_select %p195, %s196, %s197
      %p201 = pneg %p195
      %p202 = scmp.eq.s32.totalorder %s28, 3
      %p203 = por %p201, %p202
      %p204 = scmp.ne.s32.totalorder %s196, %s199
      %p205 = scmp.eq.s32.totalorder %s28, 0
      %p206 = por %p204, %p205
      %p207 = scmp.ne.s32.totalorder %s196, %s199
      %p208 = scmp.eq.s32.totalorder %s33, 3
      %p209 = por %p207, %p208
      %p210 = scmp.ne.s32.totalorder %s199, %s200
      %p211 = scmp.eq.s32.totalorder %s33, 0
      %p212 = por %p210, %p211
      %p213 = scmp.ne.s32.totalorder %s199, %s200
      %p214 = scmp.eq.s32.totalorder %s34, 3
      %p215 = por %p213, %p214
      %p217 = scmp.ne.s32.totalorder %s200, %s216
      %p218 = scmp.eq.s32.totalorder %s34, 0
      %p219 = por %p217, %p218
      %s220 = ssub.s32 %s28, %s35
      %p221 = scmp.eq.s32.totalorder %s220, 0
      %s223 = sadd.s32 %s222, 1
      %s224 = scalar_select %p221, %s222, %s223
      %p227 = pneg %p221
      %p228 = scmp.eq.s32.totalorder %s28, 3
      %p229 = por %p227, %p228
      %p230 = scmp.ne.s32.totalorder %s222, %s225
      %p231 = scmp.eq.s32.totalorder %s28, 0
      %p232 = por %p230, %p231
      %p233 = scmp.ne.s32.totalorder %s222, %s225
      %p234 = scmp.eq.s32.totalorder %s33, 3
      %p235 = por %p233, %p234
      %p236 = scmp.ne.s32.totalorder %s225, %s226
      %p237 = scmp.eq.s32.totalorder %s33, 0
      %p238 = por %p236, %p237
      %p239 = scmp.ne.s32.totalorder %s225, %s226
      %p240 = scmp.eq.s32.totalorder %s34, 3
      %p241 = por %p239, %p240
      %p243 = scmp.ne.s32.totalorder %s226, %s242
      %p244 = scmp.eq.s32.totalorder %s34, 0
      %p245 = por %p243, %p244
      %p246 = scmp.le.s32.totalorder 1, %s28
      %p247 = scmp.lt.s32.totalorder %s28, 5
      %p248 = pnand %p246, %p247
      %p249 = pneg %p248
      // Predicated region
      $region9: #{tpu_custom_call.1} parent=5 // pred_check
        _
      $region10: #{tpu_custom_call.1} parent=5 // pred_check_branch
        %251 = sbr.rel (%p248) target = $region12
      $region11: #{tpu_custom_call.1} parent=5 // pred_region
        %s252 = ssub.s32 %s28, 1
      $region12: #{tpu_custom_call.1} parent=5 // pred_fallthru
        _
      %p253 = scmp.lt.s32.totalorder %s28, 4
      // Predicated region
      $region13: #{tpu_custom_call.1} parent=5 // pred_check
        %p254 = pneg %p253
      $region14: #{tpu_custom_call.1} parent=5 // pred_check_branch
        %256 = sbr.rel (%p254) target = $region16
      $region15: #{tpu_custom_call.1} parent=5 // pred_region
        // Predicated region
        $region17: #{tpu_custom_call.1} parent=15 // pred_check
          %p257 = pneg %p48
        $region18: #{tpu_custom_call.1} parent=15 // pred_check_branch
          %259 = sbr.rel (%p257) target = $region20
        $region19: #{tpu_custom_call.1} parent=15 // pred_region
          %s260 = sand.u32 %s38, 1
          %s261 = scalar_lea.sflag [#allocation3], %s260
          %s262 = sand.u32 %s38, 1
          %s263 = smul.addr %s262, 64
          %s264 = scalar_lea.vmem [#allocation2], %s263
          %s265 = smul.u32 16, %s28
          %267 = vsyncadd %s261, 0
          %s268 = smul.addr %s265, 4
          %s269 = scalar_lea.hbm %s0, %s268
          %s270 = sshll.u32 %s269, 4
          %s271 = int_to_ptr.hbm [resolvable:$true] %s270
          %s272 = sshll.u32 %s264, 4
          %s273 = int_to_ptr.vmem [resolvable:$true] %s272
          %278 = dma.hbm_to_vmem [thread:$0]  %s271, 1024, %s273, %s261, 64, 64, 4
        $region20: #{tpu_custom_call.1} parent=15 // pred_fallthru
          _
        // Predicated region
        $region21: #{tpu_custom_call.1} parent=15 // pred_check
          %p279 = pneg %p76
        $region22: #{tpu_custom_call.1} parent=15 // pred_check_branch
          %281 = sbr.rel (%p279) target = $region24
        $region23: #{tpu_custom_call.1} parent=15 // pred_region
          %s282 = sand.u32 %s28, 1
          %s283 = scalar_lea.sflag [#allocation6], %s282
          %s284 = sand.u32 %s66, 1
          %s285 = smul.addr %s284, 64
          %s286 = scalar_lea.vmem [#allocation5], %s285
          %s287 = smul.u32 16, %s28
          %289 = vsyncadd %s283, 0
          %s290 = smul.addr %s287, 4
          %s291 = sadd.s32 %s28, %s290
          %s292 = smul.addr %s291, 4
          %s293 = scalar_lea.hbm %s1, %s292
          %s294 = sshll.u32 %s293, 4
          %s295 = int_to_ptr.hbm [resolvable:$true] %s294
          %s296 = sshll.u32 %s286, 4
          %s297 = int_to_ptr.vmem [resolvable:$true] %s296
          %302 = dma.hbm_to_vmem [thread:$0]  %s295, 1024, %s297, %s283, 256, 64, 4
        $region24: #{tpu_custom_call.1} parent=15 // pred_fallthru
          _
        // Predicated region
        $region25: #{tpu_custom_call.1} parent=15 // pred_check
          %p303 = pneg %p102
        $region26: #{tpu_custom_call.1} parent=15 // pred_check_branch
          %305 = sbr.rel (%p303) target = $region28
        $region27: #{tpu_custom_call.1} parent=15 // pred_region
          %s306 = sand.u32 %s28, 1
          %s307 = scalar_lea.sflag [#allocation6], %s306
          %s308 = sand.u32 %s92, 1
          %s309 = smul.addr %s308, 64
          %s310 = scalar_lea.vmem [#allocation7], %s309
          %312 = vsyncadd %s307, 0
          %s313 = smul.addr %s28, 16
          %s314 = smul.addr %s313, 4
          %s315 = scalar_lea.hbm %s2, %s314
          %s316 = sshll.u32 %s315, 4
          %s317 = int_to_ptr.hbm [resolvable:$true] %s316
          %s318 = sshll.u32 %s310, 4
          %s319 = int_to_ptr.vmem [resolvable:$true] %s318
          %324 = dma.hbm_to_vmem [thread:$0]  %s317, 1024, %s319, %s307, 64, 64, 4
        $region28: #{tpu_custom_call.1} parent=15 // pred_fallthru
          _
        // Predicated region
        $region29: #{tpu_custom_call.1} parent=15 // pred_check
          %p325 = pneg %p128
        $region30: #{tpu_custom_call.1} parent=15 // pred_check_branch
          %327 = sbr.rel (%p325) target = $region32
        $region31: #{tpu_custom_call.1} parent=15 // pred_region
          %s328 = sand.u32 %s28, 1
          %s329 = scalar_lea.sflag [#allocation9], %s328
          %s330 = sand.u32 %s118, 1
          %s331 = scalar_lea.vmem [#allocation8], %s330
          %333 = vsyncadd %s329, 0
          %s334 = scalar_lea.hbm %s3, %s28
          %s336 = sshll.u32 %s334, 4
          %s337 = int_to_ptr.hbm [resolvable:$true] %s336
          %s338 = sshll.u32 %s331, 4
          %s339 = int_to_ptr.vmem [resolvable:$true] %s338
          %341 = dma.hbm_to_vmem [thread:$0]  %s337, 16, %s339, %s329
        $region32: #{tpu_custom_call.1} parent=15 // pred_fallthru
          _
        // Predicated region
        $region33: #{tpu_custom_call.1} parent=15 // pred_check
          %p342 = pneg %p154
        $region34: #{tpu_custom_call.1} parent=15 // pred_check_branch
          %344 = sbr.rel (%p342) target = $region36
        $region35: #{tpu_custom_call.1} parent=15 // pred_region
          %s345 = sand.u32 %s28, 1
          %s346 = scalar_lea.sflag [#allocation9], %s345
          %s347 = sand.u32 %s144, 1
          %s348 = smul.addr %s347, 64
          %s349 = scalar_lea.vmem [#allocation10], %s348
          %351 = vsyncadd %s346, 0
          %s352 = smul.addr %s28, 16
          %s353 = smul.addr %s352, 4
          %s354 = scalar_lea.hbm %s4, %s353
          %s355 = sshll.u32 %s354, 4
          %s356 = int_to_ptr.hbm [resolvable:$true] %s355
          %s357 = sshll.u32 %s349, 4
          %s358 = int_to_ptr.vmem [resolvable:$true] %s357
          %363 = dma.hbm_to_vmem [thread:$0]  %s356, 1024, %s358, %s346, 64, 64, 4
        $region36: #{tpu_custom_call.1} parent=15 // pred_fallthru
          _
        // Predicated region
        $region37: #{tpu_custom_call.1} parent=15 // pred_check
          %p364 = pneg %p180
        $region38: #{tpu_custom_call.1} parent=15 // pred_check_branch
          %366 = sbr.rel (%p364) target = $region40
        $region39: #{tpu_custom_call.1} parent=15 // pred_region
          %p367 = scmp.lt.s32.totalorder %s28, 3
          %s368 = scalar_select %p367, %s28, 3
          %s369 = scalar_lea.vmem %s5, %s368
        $region40: #{tpu_custom_call.1} parent=15 // pred_fallthru
          _
        // Predicated region
        $region41: #{tpu_custom_call.1} parent=15 // pred_check
          %p370 = pneg %p206
        $region42: #{tpu_custom_call.1} parent=15 // pred_check_branch
          %372 = sbr.rel (%p370) target = $region44
        $region43: #{tpu_custom_call.1} parent=15 // pred_region
          %s373 = sand.u32 %s196, 1
          %s374 = scalar_lea.sflag [#allocation12], %s373
          %s375 = sand.u32 %s196, 1
          %s376 = smul.addr %s375, 64
          %s377 = scalar_lea.vmem [#allocation11], %s376
          %379 = vsyncadd %s374, 0
          %s380 = smul.addr %s28, 16
          %s381 = smul.addr %s380, 4
          %s382 = scalar_lea.hbm %s6, %s381
          %s383 = sshll.u32 %s382, 4
          %s384 = int_to_ptr.hbm [resolvable:$true] %s383
          %s385 = sshll.u32 %s377, 4
          %s386 = int_to_ptr.vmem [resolvable:$true] %s385
          %391 = dma.hbm_to_vmem [thread:$0]  %s384, 1024, %s386, %s374, 64, 64, 4
        $region44: #{tpu_custom_call.1} parent=15 // pred_fallthru
          _
      $region16: #{tpu_custom_call.1} parent=5 // pred_fallthru
        _
      %p392 = scmp.le.s32.totalorder 1, %s28
      %p393 = scmp.lt.s32.totalorder %s28, 5
      %p394 = pnand %p392, %p393
      %p395 = pneg %p394
      // Predicated region
      $region45: #{tpu_custom_call.1} parent=5 // pred_check
        _
      $region46: #{tpu_custom_call.1} parent=5 // pred_check_branch
        %397 = sbr.rel (%p394) target = $region48
      $region47: #{tpu_custom_call.1} parent=5 // pred_region
        %s398 = ssub.s32 %s28, 1
        %s399 = sand.u32 %s41, 1
        %s400 = scalar_lea.sflag [#allocation3], %s399
        %s401 = sand.u32 %s41, 1
        %s402 = smul.addr %s401, 64
        %s403 = scalar_lea.vmem [#allocation2], %s402
        // Predicated region
        $region49: #{tpu_custom_call.1} parent=47 // pred_check
          %p404 = pneg %p54
        $region50: #{tpu_custom_call.1} parent=47 // pred_check_branch
          %406 = sbr.rel (%p404) target = $region52
        $region51: #{tpu_custom_call.1} parent=47 // pred_region
          %408 = dma.done %s400, 1024
        $region52: #{tpu_custom_call.1} parent=47 // pred_fallthru
          _
        %s409 = sand.u32 %s33, 1
        %s410 = scalar_lea.sflag [#allocation6], %s409
        %s411 = sand.u32 %s69, 1
        %s412 = smul.addr %s411, 64
        %s413 = scalar_lea.vmem [#allocation5], %s412
        // Predicated region
        $region53: #{tpu_custom_call.1} parent=47 // pred_check
          %p414 = pneg %p82
        $region54: #{tpu_custom_call.1} parent=47 // pred_check_branch
          %416 = sbr.rel (%p414) target = $region56
        $region55: #{tpu_custom_call.1} parent=47 // pred_region
          %418 = dma.done %s410, 1024
        $region56: #{tpu_custom_call.1} parent=47 // pred_fallthru
          _
        %s419 = sand.u32 %s33, 1
        %s420 = scalar_lea.sflag [#allocation6], %s419
        %s421 = sand.u32 %s95, 1
        %s422 = smul.addr %s421, 64
        %s423 = scalar_lea.vmem [#allocation7], %s422
        // Predicated region
        $region57: #{tpu_custom_call.1} parent=47 // pred_check
          %p424 = pneg %p108
        $region58: #{tpu_custom_call.1} parent=47 // pred_check_branch
          %426 = sbr.rel (%p424) target = $region60
        $region59: #{tpu_custom_call.1} parent=47 // pred_region
          %428 = dma.done %s420, 1024
        $region60: #{tpu_custom_call.1} parent=47 // pred_fallthru
          _
        %s429 = sand.u32 %s33, 1
        %s430 = scalar_lea.sflag [#allocation9], %s429
        %s431 = sand.u32 %s121, 1
        %s432 = scalar_lea.vmem [#allocation8], %s431
        // Predicated region
        $region61: #{tpu_custom_call.1} parent=47 // pred_check
          %p433 = pneg %p134
        $region62: #{tpu_custom_call.1} parent=47 // pred_check_branch
          %435 = sbr.rel (%p433) target = $region64
        $region63: #{tpu_custom_call.1} parent=47 // pred_region
          %437 = dma.done %s430, 16
        $region64: #{tpu_custom_call.1} parent=47 // pred_fallthru
          _
        %s438 = sand.u32 %s33, 1
        %s439 = scalar_lea.sflag [#allocation9], %s438
        %s440 = sand.u32 %s147, 1
        %s441 = smul.addr %s440, 64
        %s442 = scalar_lea.vmem [#allocation10], %s441
        // Predicated region
        $region65: #{tpu_custom_call.1} parent=47 // pred_check
          %p443 = pneg %p160
        $region66: #{tpu_custom_call.1} parent=47 // pred_check_branch
          %445 = sbr.rel (%p443) target = $region68
        $region67: #{tpu_custom_call.1} parent=47 // pred_region
          %447 = dma.done %s439, 1024
        $region68: #{tpu_custom_call.1} parent=47 // pred_fallthru
          _
        %s448 = sand.u32 %s199, 1
        %s449 = scalar_lea.sflag [#allocation12], %s448
        %s450 = sand.u32 %s199, 1
        %s451 = smul.addr %s450, 64
        %s452 = scalar_lea.vmem [#allocation11], %s451
        // Predicated region
        $region69: #{tpu_custom_call.1} parent=47 // pred_check
          %p453 = pneg %p212
        $region70: #{tpu_custom_call.1} parent=47 // pred_check_branch
          %455 = sbr.rel (%p453) target = $region72
        $region71: #{tpu_custom_call.1} parent=47 // pred_region
          %457 = dma.done %s449, 1024
        $region72: #{tpu_custom_call.1} parent=47 // pred_fallthru
          _
        %s458 = sand.u32 %s41, 1
        %s459 = scalar_lea.sflag [#allocation3], %s458
        %s460 = sand.u32 %s41, 1
        %s461 = smul.addr %s460, 64
        %s462 = scalar_lea.vmem [#allocation2], %s461
        %p463 = pneg %p54
        %p464 = pneg %p51
        %s465 = sand.u32 %s33, 1
        %s466 = scalar_lea.sflag [#allocation6], %s465
        %s467 = sand.u32 %s69, 1
        %s468 = smul.addr %s467, 64
        %s469 = scalar_lea.vmem [#allocation5], %s468
        %p470 = pneg %p82
        %p471 = pneg %p79
        %s472 = sand.u32 %s33, 1
        %s473 = scalar_lea.sflag [#allocation6], %s472
        %s474 = sand.u32 %s95, 1
        %s475 = smul.addr %s474, 64
        %s476 = scalar_lea.vmem [#allocation7], %s475
        %p477 = pneg %p108
        %p478 = pneg %p105
        %s479 = sand.u32 %s33, 1
        %s480 = scalar_lea.sflag [#allocation9], %s479
        %s481 = sand.u32 %s121, 1
        %s482 = scalar_lea.vmem [#allocation8], %s481
        %p483 = pneg %p134
        %p484 = pneg %p131
        %s485 = sand.u32 %s33, 1
        %s486 = scalar_lea.sflag [#allocation9], %s485
        %s487 = sand.u32 %s147, 1
        %s488 = smul.addr %s487, 64
        %s489 = scalar_lea.vmem [#allocation10], %s488
        %p490 = pneg %p160
        %p491 = pneg %p157
        %p492 = scmp.lt.s32.totalorder %s33, 3
        %s493 = scalar_select %p492, %s33, 3
        %s494 = scalar_lea.vmem %s5, %s493
        %p495 = pneg %p186
        %p496 = pneg %p183
        %s497 = sand.u32 %s199, 1
        %s498 = scalar_lea.sflag [#allocation12], %s497
        %s499 = sand.u32 %s199, 1
        %s500 = smul.addr %s499, 64
        %s501 = scalar_lea.vmem [#allocation11], %s500
        %p502 = pneg %p212
        %p503 = pneg %p209
        %p504 = pneg %p238
        %p505 = pneg %p235
        %s506 = sand.u32 %s225, 1
        %s507 = scalar_lea.sflag [#allocation4], %s506
        %s508 = sand.u32 %s225, 1
        %s509 = smul.addr %s508, 64
        %s510 = scalar_lea.vmem [#allocation13], %s509
        %s511 = smul.u32 16, %s33
        %s512 = smul.u32 16, %s33
        %p513 = scmp.lt.s32.totalorder %s33, 3
        %s514 = scalar_select %p513, %s33, 3
        %s515 = scalar_lea.vmem %s5, %s514
        %s516 = smul.u32 16, %s33
        %v517 = vld [vmem:[%s413] sm:$0xf]
        %v518 = vld [vmem:[%s413 + $0x4] sm:$0xf]
        %v519 = vld [vmem:[%s413 + $0x8] sm:$0xf]
        %v520 = vld [vmem:[%s413 + $0xc] sm:$0xf]
        %v521 = vld [vmem:[%s413 + $0x10] sm:$0xf]
        %v522 = vld [vmem:[%s413 + $0x14] sm:$0xf]
        %v523 = vld [vmem:[%s413 + $0x18] sm:$0xf]
        %v524 = vld [vmem:[%s413 + $0x1c] sm:$0xf]
        %v525 = vld [vmem:[%s413 + $0x20] sm:$0xf]
        %v526 = vld [vmem:[%s413 + $0x24] sm:$0xf]
        %v527 = vld [vmem:[%s413 + $0x28] sm:$0xf]
        %v528 = vld [vmem:[%s413 + $0x2c] sm:$0xf]
        %v529 = vld [vmem:[%s413 + $0x30] sm:$0xf]
        %v530 = vld [vmem:[%s413 + $0x34] sm:$0xf]
        %v531 = vld [vmem:[%s413 + $0x38] sm:$0xf]
        %v532 = vld [vmem:[%s413 + $0x3c] sm:$0xf]
        %v533 = vld [vmem:[%s403] sm:$0xf]
        %v534 = vld [vmem:[%s403 + $0x4] sm:$0xf]
        %v535 = vld [vmem:[%s403 + $0x8] sm:$0xf]
        %v536 = vld [vmem:[%s403 + $0xc] sm:$0xf]
        %v537 = vld [vmem:[%s403 + $0x10] sm:$0xf]
        %v538 = vld [vmem:[%s403 + $0x14] sm:$0xf]
        %v539 = vld [vmem:[%s403 + $0x18] sm:$0xf]
        %v540 = vld [vmem:[%s403 + $0x1c] sm:$0xf]
        %v541 = vld [vmem:[%s403 + $0x20] sm:$0xf]
        %v542 = vld [vmem:[%s403 + $0x24] sm:$0xf]
        %v543 = vld [vmem:[%s403 + $0x28] sm:$0xf]
        %v544 = vld [vmem:[%s403 + $0x2c] sm:$0xf]
        %v545 = vld [vmem:[%s403 + $0x30] sm:$0xf]
        %v546 = vld [vmem:[%s403 + $0x34] sm:$0xf]
        %v547 = vld [vmem:[%s403 + $0x38] sm:$0xf]
        %v548 = vld [vmem:[%s403 + $0x3c] sm:$0xf]
        %v549 = vld [vmem:[%s423] sm:$0xf]
        %v550 = vld [vmem:[%s423 + $0x4] sm:$0xf]
        %v551 = vld [vmem:[%s423 + $0x8] sm:$0xf]
        %v552 = vld [vmem:[%s423 + $0xc] sm:$0xf]
        %v553 = vld [vmem:[%s423 + $0x10] sm:$0xf]
        %v554 = vld [vmem:[%s423 + $0x14] sm:$0xf]
        %v555 = vld [vmem:[%s423 + $0x18] sm:$0xf]
        %v556 = vld [vmem:[%s423 + $0x1c] sm:$0xf]
        %v557 = vld [vmem:[%s423 + $0x20] sm:$0xf]
        %v558 = vld [vmem:[%s423 + $0x24] sm:$0xf]
        %v559 = vld [vmem:[%s423 + $0x28] sm:$0xf]
        %v560 = vld [vmem:[%s423 + $0x2c] sm:$0xf]
        %v561 = vld [vmem:[%s423 + $0x30] sm:$0xf]
        %v562 = vld [vmem:[%s423 + $0x34] sm:$0xf]
        %v563 = vld [vmem:[%s423 + $0x38] sm:$0xf]
        %v564 = vld [vmem:[%s423 + $0x3c] sm:$0xf]
        %v581 = vunpack.c.l.b16 %v533
        %v582 = vunpack.c.l.b16 %v534
        %v583 = vunpack.c.l.b16 %v535
        %v584 = vunpack.c.l.b16 %v536
        %v585 = vunpack.c.l.b16 %v537
        %v586 = vunpack.c.l.b16 %v538
        %v587 = vunpack.c.l.b16 %v539
        %v588 = vunpack.c.l.b16 %v540
        %v589 = vunpack.c.l.b16 %v541
        %v590 = vunpack.c.l.b16 %v542
        %v591 = vunpack.c.l.b16 %v543
        %v592 = vunpack.c.l.b16 %v544
        %v593 = vunpack.c.l.b16 %v545
        %v594 = vunpack.c.l.b16 %v546
        %v595 = vunpack.c.l.b16 %v547
        %v596 = vunpack.c.l.b16 %v548
        %v597 = vpack.c.b16 %v582, %v581
        %v598 = vpack.c.b16 %v584, %v583
        %v599 = vpack.c.b16 %v586, %v585
        %v600 = vpack.c.b16 %v588, %v587
        %v601 = vpack.c.b16 %v590, %v589
        %v602 = vpack.c.b16 %v592, %v591
        %v603 = vpack.c.b16 %v594, %v593
        %v604 = vpack.c.b16 %v596, %v595
        %v629 = vunpack.c.l.b16 %v549
        %v630 = vunpack.c.l.b16 %v550
        %v631 = vunpack.c.l.b16 %v551
        %v632 = vunpack.c.l.b16 %v552
        %v633 = vunpack.c.l.b16 %v553
        %v634 = vunpack.c.l.b16 %v554
        %v635 = vunpack.c.l.b16 %v555
        %v636 = vunpack.c.l.b16 %v556
        %v637 = vunpack.c.l.b16 %v557
        %v638 = vunpack.c.l.b16 %v558
        %v639 = vunpack.c.l.b16 %v559
        %v640 = vunpack.c.l.b16 %v560
        %v641 = vunpack.c.l.b16 %v561
        %v642 = vunpack.c.l.b16 %v562
        %v643 = vunpack.c.l.b16 %v563
        %v644 = vunpack.c.l.b16 %v564
        %v645 = vpack.c.b16 %v630, %v629
        %v646 = vpack.c.b16 %v632, %v631
        %v647 = vpack.c.b16 %v634, %v633
        %v648 = vpack.c.b16 %v636, %v635
        %v649 = vpack.c.b16 %v638, %v637
        %v650 = vpack.c.b16 %v640, %v639
        %v651 = vpack.c.b16 %v642, %v641
        %v652 = vpack.c.b16 %v644, %v643
        %661 = vmatpush.bf16.msra.mxu0 %v652
        %662 = vmatpush.bf16.msra.mxu0 %v651
        %663 = vmatpush.bf16.msra.mxu0 %v650
        %664 = vmatpush.bf16.msra.mxu0 %v649
        %665 = vmatpush.bf16.msra.mxu0 %v648
        %666 = vmatpush.bf16.msra.mxu0 %v647
        %667 = vmatpush.bf16.msra.mxu0 %v646
        %668 = vmatpush.bf16.msra.mxu0 %v645
        %669 = vmatmul.bf16.gmra.mxu0 %v597
        %v670 = vpop.f32.mrf.mxu0
        %v671 = vadd.f32 0.0, %v670
        %v672 = vpop.f32.mrf.mxu0
        %v673 = vadd.f32 0.0, %v672
        %674 = vmatmul.bf16.gmra.mxu0 %v598
        %v675 = vpop.f32.mrf.mxu0
        %v676 = vadd.f32 0.0, %v675
        %v677 = vpop.f32.mrf.mxu0
        %v678 = vadd.f32 0.0, %v677
        %679 = vmatmul.bf16.gmra.mxu0 %v599
        %v680 = vpop.f32.mrf.mxu0
        %v681 = vadd.f32 0.0, %v680
        %v682 = vpop.f32.mrf.mxu0
        %v683 = vadd.f32 0.0, %v682
        %684 = vmatmul.bf16.gmra.mxu0 %v600
        %v685 = vpop.f32.mrf.mxu0
        %v686 = vadd.f32 0.0, %v685
        %v687 = vpop.f32.mrf.mxu0
        %v688 = vadd.f32 0.0, %v687
        %689 = vmatmul.bf16.gmra.mxu0 %v601
        %v690 = vpop.f32.mrf.mxu0
        %v691 = vadd.f32 0.0, %v690
        %v692 = vpop.f32.mrf.mxu0
        %v693 = vadd.f32 0.0, %v692
        %694 = vmatmul.bf16.gmra.mxu0 %v602
        %v695 = vpop.f32.mrf.mxu0
        %v696 = vadd.f32 0.0, %v695
        %v697 = vpop.f32.mrf.mxu0
        %v698 = vadd.f32 0.0, %v697
        %699 = vmatmul.bf16.gmra.mxu0 %v603
        %v700 = vpop.f32.mrf.mxu0
        %v701 = vadd.f32 0.0, %v700
        %v702 = vpop.f32.mrf.mxu0
        %v703 = vadd.f32 0.0, %v702
        %704 = vmatmul.bf16.gmra.mxu0 %v604
        %v705 = vpop.f32.mrf.mxu0
        %v706 = vadd.f32 0.0, %v705
        %v707 = vpop.f32.mrf.mxu0
        %v708 = vadd.f32 0.0, %v707
        %709 = vdwg.mxu0
        %v710 = vpack.c.bf16 %v673, %v671
        %v711 = vpack.c.bf16 %v678, %v676
        %v712 = vpack.c.bf16 %v683, %v681
        %v713 = vpack.c.bf16 %v688, %v686
        %v714 = vpack.c.bf16 %v693, %v691
        %v715 = vpack.c.bf16 %v698, %v696
        %v716 = vpack.c.bf16 %v703, %v701
        %v717 = vpack.c.bf16 %v708, %v706
        %v718 = vld [vmem:[%s432] sm:$0x1]
        %v720 = vperm.slane %v718, 0
        %v738 = vunpack.c.l.b16 %v517
        %v739 = vunpack.c.l.b16 %v518
        %v740 = vunpack.c.l.b16 %v519
        %v741 = vunpack.c.l.b16 %v520
        %v742 = vunpack.c.l.b16 %v521
        %v743 = vunpack.c.l.b16 %v522
        %v744 = vunpack.c.l.b16 %v523
        %v745 = vunpack.c.l.b16 %v524
        %v746 = vunpack.c.l.b16 %v525
        %v747 = vunpack.c.l.b16 %v526
        %v748 = vunpack.c.l.b16 %v527
        %v749 = vunpack.c.l.b16 %v528
        %v750 = vunpack.c.l.b16 %v529
        %v751 = vunpack.c.l.b16 %v530
        %v752 = vunpack.c.l.b16 %v531
        %v753 = vunpack.c.l.b16 %v532
        %v754 = vpack.c.b16 %v739, %v738
        %v755 = vpack.c.b16 %v741, %v740
        %v756 = vpack.c.b16 %v743, %v742
        %v757 = vpack.c.b16 %v745, %v744
        %v758 = vpack.c.b16 %v747, %v746
        %v759 = vpack.c.b16 %v749, %v748
        %v760 = vpack.c.b16 %v751, %v750
        %v761 = vpack.c.b16 %v753, %v752
        %770 = vmatpush.bf16.msra.mxu0 %v717
        %771 = vmatpush.bf16.msra.mxu0 %v716
        %772 = vmatpush.bf16.msra.mxu0 %v715
        %773 = vmatpush.bf16.msra.mxu0 %v714
        %774 = vmatpush.bf16.msra.mxu0 %v713
        %775 = vmatpush.bf16.msra.mxu0 %v712
        %776 = vmatpush.bf16.msra.mxu0 %v711
        %777 = vmatpush.bf16.msra.mxu0 %v710
        %778 = vmatmul.bf16.gmra.mxu0 %v754
        %v779 = vpop.f32.mrf.mxu0
        %v780 = vadd.f32 %v720, %v779
        %v781 = vpop.f32.mrf.mxu0
        %v782 = vadd.f32 %v720, %v781
        %783 = vmatmul.bf16.gmra.mxu0 %v755
        %v784 = vpop.f32.mrf.mxu0
        %v785 = vadd.f32 %v720, %v784
        %v786 = vpop.f32.mrf.mxu0
        %v787 = vadd.f32 %v720, %v786
        %788 = vmatmul.bf16.gmra.mxu0 %v756
        %v789 = vpop.f32.mrf.mxu0
        %v790 = vadd.f32 %v720, %v789
        %v791 = vpop.f32.mrf.mxu0
        %v792 = vadd.f32 %v720, %v791
        %793 = vmatmul.bf16.gmra.mxu0 %v757
        %v794 = vpop.f32.mrf.mxu0
        %v795 = vadd.f32 %v720, %v794
        %v796 = vpop.f32.mrf.mxu0
        %v797 = vadd.f32 %v720, %v796
        %798 = vmatmul.bf16.gmra.mxu0 %v758
        %v799 = vpop.f32.mrf.mxu0
        %v800 = vadd.f32 %v720, %v799
        %v801 = vpop.f32.mrf.mxu0
        %v802 = vadd.f32 %v720, %v801
        %803 = vmatmul.bf16.gmra.mxu0 %v759
        %v804 = vpop.f32.mrf.mxu0
        %v805 = vadd.f32 %v720, %v804
        %v806 = vpop.f32.mrf.mxu0
        %v807 = vadd.f32 %v720, %v806
        %808 = vmatmul.bf16.gmra.mxu0 %v760
        %v809 = vpop.f32.mrf.mxu0
        %v810 = vadd.f32 %v720, %v809
        %v811 = vpop.f32.mrf.mxu0
        %v812 = vadd.f32 %v720, %v811
        %813 = vmatmul.bf16.gmra.mxu0 %v761
        %v814 = vpop.f32.mrf.mxu0
        %v815 = vadd.f32 %v720, %v814
        %v816 = vpop.f32.mrf.mxu0
        %v817 = vadd.f32 %v720, %v816
        %818 = vdwg.mxu0
        %v819 = vmax.f32 %v780, 0.0
        %v820 = vmax.f32 %v782, 0.0
        %v821 = vmax.f32 %v785, 0.0
        %v822 = vmax.f32 %v787, 0.0
        %v823 = vmax.f32 %v790, 0.0
        %v824 = vmax.f32 %v792, 0.0
        %v825 = vmax.f32 %v795, 0.0
        %v826 = vmax.f32 %v797, 0.0
        %v827 = vmax.f32 %v800, 0.0
        %v828 = vmax.f32 %v802, 0.0
        %v829 = vmax.f32 %v805, 0.0
        %v830 = vmax.f32 %v807, 0.0
        %v831 = vmax.f32 %v810, 0.0
        %v832 = vmax.f32 %v812, 0.0
        %v833 = vmax.f32 %v815, 0.0
        %v834 = vmax.f32 %v817, 0.0
        %v835 = vpack.c.bf16 %v820, %v819
        %v836 = vpack.c.bf16 %v822, %v821
        %v837 = vpack.c.bf16 %v824, %v823
        %v838 = vpack.c.bf16 %v826, %v825
        %v839 = vpack.c.bf16 %v828, %v827
        %v840 = vpack.c.bf16 %v830, %v829
        %v841 = vpack.c.bf16 %v832, %v831
        %v842 = vpack.c.bf16 %v834, %v833
        %v843 = vld [vmem:[%s442] sm:$0xf]
        %v844 = vld [vmem:[%s442 + $0x4] sm:$0xf]
        %v845 = vld [vmem:[%s442 + $0x8] sm:$0xf]
        %v846 = vld [vmem:[%s442 + $0xc] sm:$0xf]
        %v847 = vld [vmem:[%s442 + $0x10] sm:$0xf]
        %v848 = vld [vmem:[%s442 + $0x14] sm:$0xf]
        %v849 = vld [vmem:[%s442 + $0x18] sm:$0xf]
        %v850 = vld [vmem:[%s442 + $0x1c] sm:$0xf]
        %v851 = vld [vmem:[%s442 + $0x20] sm:$0xf]
        %v852 = vld [vmem:[%s442 + $0x24] sm:$0xf]
        %v853 = vld [vmem:[%s442 + $0x28] sm:$0xf]
        %v854 = vld [vmem:[%s442 + $0x2c] sm:$0xf]
        %v855 = vld [vmem:[%s442 + $0x30] sm:$0xf]
        %v856 = vld [vmem:[%s442 + $0x34] sm:$0xf]
        %v857 = vld [vmem:[%s442 + $0x38] sm:$0xf]
        %v858 = vld [vmem:[%s442 + $0x3c] sm:$0xf]
        %v875 = vunpack.c.l.b16 %v843
        %v876 = vunpack.c.l.b16 %v844
        %v877 = vunpack.c.l.b16 %v845
        %v878 = vunpack.c.l.b16 %v846
        %v879 = vunpack.c.l.b16 %v847
        %v880 = vunpack.c.l.b16 %v848
        %v881 = vunpack.c.l.b16 %v849
        %v882 = vunpack.c.l.b16 %v850
        %v883 = vunpack.c.l.b16 %v851
        %v884 = vunpack.c.l.b16 %v852
        %v885 = vunpack.c.l.b16 %v853
        %v886 = vunpack.c.l.b16 %v854
        %v887 = vunpack.c.l.b16 %v855
        %v888 = vunpack.c.l.b16 %v856
        %v889 = vunpack.c.l.b16 %v857
        %v890 = vunpack.c.l.b16 %v858
        %v891 = vpack.c.b16 %v876, %v875
        %v892 = vpack.c.b16 %v878, %v877
        %v893 = vpack.c.b16 %v880, %v879
        %v894 = vpack.c.b16 %v882, %v881
        %v895 = vpack.c.b16 %v884, %v883
        %v896 = vpack.c.b16 %v886, %v885
        %v897 = vpack.c.b16 %v888, %v887
        %v898 = vpack.c.b16 %v890, %v889
        %907 = vmatpush.bf16.msra.mxu0 %v898
        %908 = vmatpush.bf16.msra.mxu0 %v897
        %909 = vmatpush.bf16.msra.mxu0 %v896
        %910 = vmatpush.bf16.msra.mxu0 %v895
        %911 = vmatpush.bf16.msra.mxu0 %v894
        %912 = vmatpush.bf16.msra.mxu0 %v893
        %913 = vmatpush.bf16.msra.mxu0 %v892
        %914 = vmatpush.bf16.msra.mxu0 %v891
        %915 = vmatmul.bf16.gmra.mxu0 %v835
        %v916 = vpop.f32.mrf.mxu0
        %v917 = vadd.f32 0.0, %v916
        %v918 = vpop.f32.mrf.mxu0
        %v919 = vadd.f32 0.0, %v918
        %920 = vmatmul.bf16.gmra.mxu0 %v836
        %v921 = vpop.f32.mrf.mxu0
        %v922 = vadd.f32 0.0, %v921
        %v923 = vpop.f32.mrf.mxu0
        %v924 = vadd.f32 0.0, %v923
        %925 = vmatmul.bf16.gmra.mxu0 %v837
        %v926 = vpop.f32.mrf.mxu0
        %v927 = vadd.f32 0.0, %v926
        %v928 = vpop.f32.mrf.mxu0
        %v929 = vadd.f32 0.0, %v928
        %930 = vmatmul.bf16.gmra.mxu0 %v838
        %v931 = vpop.f32.mrf.mxu0
        %v932 = vadd.f32 0.0, %v931
        %v933 = vpop.f32.mrf.mxu0
        %v934 = vadd.f32 0.0, %v933
        %935 = vmatmul.bf16.gmra.mxu0 %v839
        %v936 = vpop.f32.mrf.mxu0
        %v937 = vadd.f32 0.0, %v936
        %v938 = vpop.f32.mrf.mxu0
        %v939 = vadd.f32 0.0, %v938
        %940 = vmatmul.bf16.gmra.mxu0 %v840
        %v941 = vpop.f32.mrf.mxu0
        %v942 = vadd.f32 0.0, %v941
        %v943 = vpop.f32.mrf.mxu0
        %v944 = vadd.f32 0.0, %v943
        %945 = vmatmul.bf16.gmra.mxu0 %v841
        %v946 = vpop.f32.mrf.mxu0
        %v947 = vadd.f32 0.0, %v946
        %v948 = vpop.f32.mrf.mxu0
        %v949 = vadd.f32 0.0, %v948
        %950 = vmatmul.bf16.gmra.mxu0 %v842
        %v951 = vpop.f32.mrf.mxu0
        %v952 = vadd.f32 0.0, %v951
        %v953 = vpop.f32.mrf.mxu0
        %v954 = vadd.f32 0.0, %v953
        %955 = vdwg.mxu0
        %v956 = vpack.c.bf16 %v919, %v917
        %v957 = vpack.c.bf16 %v924, %v922
        %v958 = vpack.c.bf16 %v929, %v927
        %v959 = vpack.c.bf16 %v934, %v932
        %v960 = vpack.c.bf16 %v939, %v937
        %v961 = vpack.c.bf16 %v944, %v942
        %v962 = vpack.c.bf16 %v949, %v947
        %v963 = vpack.c.bf16 %v954, %v952
        %v964 = vld [vmem:[%s515] sm:$0x1]
        %v966 = vperm.slane %v964, 0
        %968 = vmatpush.bf16.msra.mxu0 %v963
        %969 = vmatpush.bf16.msra.mxu0 %v962
        %970 = vmatpush.bf16.msra.mxu0 %v961
        %971 = vmatpush.bf16.msra.mxu0 %v960
        %972 = vmatpush.bf16.msra.mxu0 %v959
        %973 = vmatpush.bf16.msra.mxu0 %v958
        %974 = vmatpush.bf16.msra.mxu0 %v957
        %975 = vmatpush.bf16.msra.mxu0 %v956
        %976 = vmatmul.bf16.gmra.mxu0 %v754
        %v977 = vpop.f32.mrf.mxu0
        %v978 = vadd.f32 %v966, %v977
        %v979 = vpop.f32.mrf.mxu0
        %v980 = vadd.f32 %v966, %v979
        %981 = vmatmul.bf16.gmra.mxu0 %v755
        %v982 = vpop.f32.mrf.mxu0
        %v983 = vadd.f32 %v966, %v982
        %v984 = vpop.f32.mrf.mxu0
        %v985 = vadd.f32 %v966, %v984
        %986 = vmatmul.bf16.gmra.mxu0 %v756
        %v987 = vpop.f32.mrf.mxu0
        %v988 = vadd.f32 %v966, %v987
        %v989 = vpop.f32.mrf.mxu0
        %v990 = vadd.f32 %v966, %v989
        %991 = vmatmul.bf16.gmra.mxu0 %v757
        %v992 = vpop.f32.mrf.mxu0
        %v993 = vadd.f32 %v966, %v992
        %v994 = vpop.f32.mrf.mxu0
        %v995 = vadd.f32 %v966, %v994
        %996 = vmatmul.bf16.gmra.mxu0 %v758
        %v997 = vpop.f32.mrf.mxu0
        %v998 = vadd.f32 %v966, %v997
        %v999 = vpop.f32.mrf.mxu0
        %v1000 = vadd.f32 %v966, %v999
        %1001 = vmatmul.bf16.gmra.mxu0 %v759
        %v1002 = vpop.f32.mrf.mxu0
        %v1003 = vadd.f32 %v966, %v1002
        %v1004 = vpop.f32.mrf.mxu0
        %v1005 = vadd.f32 %v966, %v1004
        %1006 = vmatmul.bf16.gmra.mxu0 %v760
        %v1007 = vpop.f32.mrf.mxu0
        %v1008 = vadd.f32 %v966, %v1007
        %v1009 = vpop.f32.mrf.mxu0
        %v1010 = vadd.f32 %v966, %v1009
        %1011 = vmatmul.bf16.gmra.mxu0 %v761
        %v1012 = vpop.f32.mrf.mxu0
        %v1013 = vadd.f32 %v966, %v1012
        %v1014 = vpop.f32.mrf.mxu0
        %v1015 = vadd.f32 %v966, %v1014
        %1016 = vdwg.mxu0
        %v1017 = vmax.f32 %v978, 0.0
        %v1018 = vmax.f32 %v980, 0.0
        %v1019 = vmax.f32 %v983, 0.0
        %v1020 = vmax.f32 %v985, 0.0
        %v1021 = vmax.f32 %v988, 0.0
        %v1022 = vmax.f32 %v990, 0.0
        %v1023 = vmax.f32 %v993, 0.0
        %v1024 = vmax.f32 %v995, 0.0
        %v1025 = vmax.f32 %v998, 0.0
        %v1026 = vmax.f32 %v1000, 0.0
        %v1027 = vmax.f32 %v1003, 0.0
        %v1028 = vmax.f32 %v1005, 0.0
        %v1029 = vmax.f32 %v1008, 0.0
        %v1030 = vmax.f32 %v1010, 0.0
        %v1031 = vmax.f32 %v1013, 0.0
        %v1032 = vmax.f32 %v1015, 0.0
        %v1033 = vpack.c.bf16 %v1018, %v1017
        %v1034 = vpack.c.bf16 %v1020, %v1019
        %v1035 = vpack.c.bf16 %v1022, %v1021
        %v1036 = vpack.c.bf16 %v1024, %v1023
        %v1037 = vpack.c.bf16 %v1026, %v1025
        %v1038 = vpack.c.bf16 %v1028, %v1027
        %v1039 = vpack.c.bf16 %v1030, %v1029
        %v1040 = vpack.c.bf16 %v1032, %v1031
        %v1041 = vld [vmem:[%s452] sm:$0xf]
        %v1042 = vld [vmem:[%s452 + $0x4] sm:$0xf]
        %v1043 = vld [vmem:[%s452 + $0x8] sm:$0xf]
        %v1044 = vld [vmem:[%s452 + $0xc] sm:$0xf]
        %v1045 = vld [vmem:[%s452 + $0x10] sm:$0xf]
        %v1046 = vld [vmem:[%s452 + $0x14] sm:$0xf]
        %v1047 = vld [vmem:[%s452 + $0x18] sm:$0xf]
        %v1048 = vld [vmem:[%s452 + $0x1c] sm:$0xf]
        %v1049 = vld [vmem:[%s452 + $0x20] sm:$0xf]
        %v1050 = vld [vmem:[%s452 + $0x24] sm:$0xf]
        %v1051 = vld [vmem:[%s452 + $0x28] sm:$0xf]
        %v1052 = vld [vmem:[%s452 + $0x2c] sm:$0xf]
        %v1053 = vld [vmem:[%s452 + $0x30] sm:$0xf]
        %v1054 = vld [vmem:[%s452 + $0x34] sm:$0xf]
        %v1055 = vld [vmem:[%s452 + $0x38] sm:$0xf]
        %v1056 = vld [vmem:[%s452 + $0x3c] sm:$0xf]
        %v1073 = vunpack.c.l.b16 %v1041
        %v1074 = vunpack.c.l.b16 %v1042
        %v1075 = vunpack.c.l.b16 %v1043
        %v1076 = vunpack.c.l.b16 %v1044
        %v1077 = vunpack.c.l.b16 %v1045
        %v1078 = vunpack.c.l.b16 %v1046
        %v1079 = vunpack.c.l.b16 %v1047
        %v1080 = vunpack.c.l.b16 %v1048
        %v1081 = vunpack.c.l.b16 %v1049
        %v1082 = vunpack.c.l.b16 %v1050
        %v1083 = vunpack.c.l.b16 %v1051
        %v1084 = vunpack.c.l.b16 %v1052
        %v1085 = vunpack.c.l.b16 %v1053
        %v1086 = vunpack.c.l.b16 %v1054
        %v1087 = vunpack.c.l.b16 %v1055
        %v1088 = vunpack.c.l.b16 %v1056
        %v1089 = vpack.c.b16 %v1074, %v1073
        %v1090 = vpack.c.b16 %v1076, %v1075
        %v1091 = vpack.c.b16 %v1078, %v1077
        %v1092 = vpack.c.b16 %v1080, %v1079
        %v1093 = vpack.c.b16 %v1082, %v1081
        %v1094 = vpack.c.b16 %v1084, %v1083
        %v1095 = vpack.c.b16 %v1086, %v1085
        %v1096 = vpack.c.b16 %v1088, %v1087
        %1105 = vmatpush.bf16.msra.mxu0 %v1096
        %1106 = vmatpush.bf16.msra.mxu0 %v1095
        %1107 = vmatpush.bf16.msra.mxu0 %v1094
        %1108 = vmatpush.bf16.msra.mxu0 %v1093
        %1109 = vmatpush.bf16.msra.mxu0 %v1092
        %1110 = vmatpush.bf16.msra.mxu0 %v1091
        %1111 = vmatpush.bf16.msra.mxu0 %v1090
        %1112 = vmatpush.bf16.msra.mxu0 %v1089
        %1113 = vmatmul.bf16.gmra.mxu0 %v1033
        %v1114 = vpop.f32.mrf.mxu0
        %v1115 = vadd.f32 0.0, %v1114
        %v1116 = vpop.f32.mrf.mxu0
        %v1117 = vadd.f32 0.0, %v1116
        %1118 = vmatmul.bf16.gmra.mxu0 %v1034
        %v1119 = vpop.f32.mrf.mxu0
        %v1120 = vadd.f32 0.0, %v1119
        %v1121 = vpop.f32.mrf.mxu0
        %v1122 = vadd.f32 0.0, %v1121
        %1123 = vmatmul.bf16.gmra.mxu0 %v1035
        %v1124 = vpop.f32.mrf.mxu0
        %v1125 = vadd.f32 0.0, %v1124
        %v1126 = vpop.f32.mrf.mxu0
        %v1127 = vadd.f32 0.0, %v1126
        %1128 = vmatmul.bf16.gmra.mxu0 %v1036
        %v1129 = vpop.f32.mrf.mxu0
        %v1130 = vadd.f32 0.0, %v1129
        %v1131 = vpop.f32.mrf.mxu0
        %v1132 = vadd.f32 0.0, %v1131
        %1133 = vmatmul.bf16.gmra.mxu0 %v1037
        %v1134 = vpop.f32.mrf.mxu0
        %v1135 = vadd.f32 0.0, %v1134
        %v1136 = vpop.f32.mrf.mxu0
        %v1137 = vadd.f32 0.0, %v1136
        %1138 = vmatmul.bf16.gmra.mxu0 %v1038
        %v1139 = vpop.f32.mrf.mxu0
        %v1140 = vadd.f32 0.0, %v1139
        %v1141 = vpop.f32.mrf.mxu0
        %v1142 = vadd.f32 0.0, %v1141
        %1143 = vmatmul.bf16.gmra.mxu0 %v1039
        %v1144 = vpop.f32.mrf.mxu0
        %v1145 = vadd.f32 0.0, %v1144
        %v1146 = vpop.f32.mrf.mxu0
        %v1147 = vadd.f32 0.0, %v1146
        %1148 = vmatmul.bf16.gmra.mxu0 %v1040
        %v1149 = vpop.f32.mrf.mxu0
        %v1150 = vadd.f32 0.0, %v1149
        %v1151 = vpop.f32.mrf.mxu0
        %v1152 = vadd.f32 0.0, %v1151
        %1153 = vdwg.mxu0
        %v1154 = vpack.c.bf16 %v1115, %v1115
        %v1155 = vpack.c.bf16 %v1117, %v1117
        %v1156 = vpack.c.bf16 %v1120, %v1120
        %v1157 = vpack.c.bf16 %v1122, %v1122
        %v1158 = vpack.c.bf16 %v1125, %v1125
        %v1159 = vpack.c.bf16 %v1127, %v1127
        %v1160 = vpack.c.bf16 %v1130, %v1130
        %v1161 = vpack.c.bf16 %v1132, %v1132
        %v1162 = vpack.c.bf16 %v1135, %v1135
        %v1163 = vpack.c.bf16 %v1137, %v1137
        %v1164 = vpack.c.bf16 %v1140, %v1140
        %v1165 = vpack.c.bf16 %v1142, %v1142
        %v1166 = vpack.c.bf16 %v1145, %v1145
        %v1167 = vpack.c.bf16 %v1147, %v1147
        %v1168 = vpack.c.bf16 %v1150, %v1150
        %v1169 = vpack.c.bf16 %v1152, %v1152
        %1170 = vst [vmem:[%s510] sm:$0xf] %v1154
        %1171 = vst [vmem:[%s510 + $0x4] sm:$0xf] %v1155
        %1172 = vst [vmem:[%s510 + $0x8] sm:$0xf] %v1156
        %1173 = vst [vmem:[%s510 + $0xc] sm:$0xf] %v1157
        %1174 = vst [vmem:[%s510 + $0x10] sm:$0xf] %v1158
        %1175 = vst [vmem:[%s510 + $0x14] sm:$0xf] %v1159
        %1176 = vst [vmem:[%s510 + $0x18] sm:$0xf] %v1160
        %1177 = vst [vmem:[%s510 + $0x1c] sm:$0xf] %v1161
        %1178 = vst [vmem:[%s510 + $0x20] sm:$0xf] %v1162
        %1179 = vst [vmem:[%s510 + $0x24] sm:$0xf] %v1163
        %1180 = vst [vmem:[%s510 + $0x28] sm:$0xf] %v1164
        %1181 = vst [vmem:[%s510 + $0x2c] sm:$0xf] %v1165
        %1182 = vst [vmem:[%s510 + $0x30] sm:$0xf] %v1166
        %1183 = vst [vmem:[%s510 + $0x34] sm:$0xf] %v1167
        %1184 = vst [vmem:[%s510 + $0x38] sm:$0xf] %v1168
        %1185 = vst [vmem:[%s510 + $0x3c] sm:$0xf] %v1169
        %s1186 = sand.u32 %s225, 1
        %s1187 = scalar_lea.sflag [#allocation4], %s1186
        %s1188 = sand.u32 %s225, 1
        %s1189 = smul.addr %s1188, 64
        %s1190 = scalar_lea.vmem [#allocation13], %s1189
        // Predicated region
        $region73: #{tpu_custom_call.1} parent=47 // pred_check
          %p1191 = pneg %p235
        $region74: #{tpu_custom_call.1} parent=47 // pred_check_branch
          %1193 = sbr.rel (%p1191) target = $region76
        $region75: #{tpu_custom_call.1} parent=47 // pred_region
          %s1194 = smul.u32 16, %s33
          %1196 = vsyncadd %s1187, 0
          %s1197 = smul.addr %s1194, 4
          %s1198 = scalar_lea.hbm %s7, %s1197
          %s1199 = sshll.u32 %s1190, 4
          %s1200 = int_to_ptr.vmem [resolvable:$true] %s1199
          %s1201 = sshll.u32 %s1198, 4
          %s1202 = int_to_ptr.hbm [resolvable:$true] %s1201
          %1207 = dma.vmem_to_hbm [thread:$0]  %s1200, 1024, %s1202, %s1187, 64, 64, 4
        $region76: #{tpu_custom_call.1} parent=47 // pred_fallthru
          _
      $region48: #{tpu_custom_call.1} parent=5 // pred_fallthru
        _
      %p1208 = scmp.le.s32.totalorder 2, %s28
      // Predicated region
      $region77: #{tpu_custom_call.1} parent=5 // pred_check
        %p1209 = pneg %p1208
      $region78: #{tpu_custom_call.1} parent=5 // pred_check_branch
        %1211 = sbr.rel (%p1209) target = $region80
      $region79: #{tpu_custom_call.1} parent=5 // pred_region
        %s1212 = ssub.s32 %s28, 2
        // Predicated region
        $region81: #{tpu_custom_call.1} parent=79 // pred_check
          %p1213 = pneg %p241
        $region82: #{tpu_custom_call.1} parent=79 // pred_check_branch
          %1215 = sbr.rel (%p1213) target = $region84
        $region83: #{tpu_custom_call.1} parent=79 // pred_region
          %s1216 = sand.u32 %s226, 1
          %s1217 = scalar_lea.sflag [#allocation4], %s1216
          %s1218 = sand.u32 %s226, 1
          %s1219 = smul.addr %s1218, 64
          %s1220 = scalar_lea.vmem [#allocation13], %s1219
          %1222 = dma.done %s1217, 1024
        $region84: #{tpu_custom_call.1} parent=79 // pred_fallthru
          _
      $region80: #{tpu_custom_call.1} parent=5 // pred_fallthru
        _
    $region6: #{tpu_custom_call.1} parent=1 // loop_footer
      %s32 = sadd.s32 1, %s28
    $region7: #{tpu_custom_call.1} parent=1 // loop_footer_branch
      %27 = sbr.rel target = $region3
    $region8: #{tpu_custom_call.1} parent=1 // loop_exit
      _
    %1223 = vsyncpa [#allocation3], 1
    %s1224 = scalar_lea.sflag [#allocation3], 1
    %1225 = vsyncpa %s1224, 1
    %1226 = vsyncpa [#allocation6], 1
    %s1227 = scalar_lea.sflag [#allocation6], 1
    %1228 = vsyncpa %s1227, 1
    %1229 = vsyncpa [#allocation9], 1
    %s1230 = scalar_lea.sflag [#allocation9], 1
    %1231 = vsyncpa %s1230, 1
    %1232 = vsyncpa [#allocation12], 1
    %s1233 = scalar_lea.sflag [#allocation12], 1
    %1234 = vsyncpa %s1233, 1
    %1235 = vsyncpa [#allocation4], 1
    %s1236 = scalar_lea.sflag [#allocation4], 1
    %1237 = vsyncpa %s1236, 1

</llo_original>
